<compile_context>
chip_gen: v7x
topology: tpu7x:2x2x1
jax: 0.10.0
libtpu: 0.0.40
codegen_flags: <defaults>
</compile_context>

<pallas_src>
import functools

import jax
import jax.numpy as jnp
import numpy as np
from jax.experimental import pallas as pl
from jax.experimental.pallas import tpu as pltpu

_BN_EPS = 1e-5
_MAX_TM = 2048                    # lane-tile size along M (multiple of 128)
_VMEM_LIMIT = 32 * 1024 * 1024    # safe on v5e / v6e / v7x


def _stats_kernel(x_ref, w_ref, sum_ref, sq_ref, *, tm, m, needs_mask):
    """Accumulate per-channel sum / sum-of-squares of y = W @ x over M tiles."""
    j = pl.program_id(0)

    @pl.when(j == 0)
    def _init():
        sum_ref[...] = jnp.zeros_like(sum_ref)
        sq_ref[...] = jnp.zeros_like(sq_ref)

    # (C_rows, C2) @ (C2, TM) -> (C_rows, TM); fused convs + channel concat.
    y = jnp.dot(w_ref[...], x_ref[...], preferred_element_type=jnp.float32)
    if needs_mask:
        col = j * tm + jax.lax.broadcasted_iota(jnp.int32, y.shape, 1)
        y = jnp.where(col < m, y, 0.0)
    # Lane-axis reductions land on the XLU, keeping VALU slots free.
    sum_ref[...] += jnp.sum(y, axis=-1, keepdims=True)
    sq_ref[...] += jnp.sum(y * y, axis=-1, keepdims=True)


def _normalize_kernel(x_ref, w_ref, shift_ref, o_ref):
    """o = (W_scaled @ x) + shift   (BN inv-std pre-folded into W rows)."""
    y = jnp.dot(w_ref[...], x_ref[...], preferred_element_type=jnp.float32)
    o_ref[...] = (y + shift_ref[...]).astype(o_ref.dtype)


def _choose_tile(m):
    if m >= 128:
        tm = min(_MAX_TM, (m // 128) * 128)
    else:
        tm = m
    num_tiles = pl.cdiv(m, tm)
    return tm, num_tiles, (num_tiles * tm != m)


def _fused_conv_bn(x_stacked, w_block):
    """y = BN(W @ x) with per-row batch statistics taken over the M (lane) axis.

    x_stacked: (C2, M) f32, w_block: (C_rows, C2) f32 -> (C_rows, M) f32.
    """
    c2, m = x_stacked.shape
    c_rows = w_block.shape[0]
    tm, num_tiles, needs_mask = _choose_tile(m)

    # Pass 1: global per-channel sum / sum-of-squares (resident accumulator).
    sum_c, sq_c = pl.pallas_call(
        functools.partial(_stats_kernel, tm=tm, m=m, needs_mask=needs_mask),
        out_shape=(jax.ShapeDtypeStruct((c_rows, 1), jnp.float32),
                   jax.ShapeDtypeStruct((c_rows, 1), jnp.float32)),
        grid=(num_tiles,),
        in_specs=[pl.BlockSpec((c2, tm), lambda j: (0, j)),
                  pl.BlockSpec((c_rows, c2), lambda j: (0, 0))],
        out_specs=(pl.BlockSpec((c_rows, 1), lambda j: (0, 0)),
                   pl.BlockSpec((c_rows, 1), lambda j: (0, 0))),
        compiler_params=pltpu.CompilerParams(
            dimension_semantics=("arbitrary",),
            vmem_limit_bytes=_VMEM_LIMIT),
    )(x_stacked, w_block)

    # Fold BN batch stats into per-channel weight scale + additive shift (tiny, plain JAX).
    mean = sum_c / m                                     # (C_rows, 1)
    var = jnp.maximum(sq_c / m - mean * mean, 0.0)       # biased variance
    inv = jax.lax.rsqrt(var + _BN_EPS)
    w_scaled = w_block * inv                             # scale folded into matmul
    shift = -mean * inv                                  # (C_rows, 1)

    # Pass 2: recompute the tiny matmul per tile and add the shift (parallel over M).
    out_mat = pl.pallas_call(
        _normalize_kernel,
        out_shape=jax.ShapeDtypeStruct((c_rows, m), jnp.float32),
        grid=(num_tiles,),
        in_specs=[pl.BlockSpec((c2, tm), lambda j: (0, j)),
                  pl.BlockSpec((c_rows, c2), lambda j: (0, 0)),
                  pl.BlockSpec((c_rows, 1), lambda j: (0, 0))],
        out_specs=pl.BlockSpec((c_rows, tm), lambda j: (0, j)),
        compiler_params=pltpu.CompilerParams(
            dimension_semantics=("parallel",),
            vmem_limit_bytes=_VMEM_LIMIT),
    )(x_stacked, w_scaled, shift)
    return out_mat


def _prep_operand(x, w1, w2):
    """NCHW input + two 1x1 conv weights -> channel-major stacked taps and a
    block-diagonal fused weight so convs + concat become one matmul."""
    N, c_in, H, W = x.shape
    assert H % 2 == 0 and W % 2 == 0, "FactorizedReduce expects even spatial dims"
    Ho, Wo = H // 2, W // 2
    m = N * Ho * Wo

    # TODO(synk): fold the stride-2 spatial subsample into the kernel DMA
    # (strided index_map over H/W from a raw HBM ref) instead of XLA slices.
    xt = jnp.transpose(x, (1, 0, 2, 3))                  # (C_in, N, H, W)
    x1 = xt[:, :, 0::2, 0::2].reshape(c_in, m)           # conv1 taps, offset (0,0)
    x2 = xt[:, :, 1::2, 1::2].reshape(c_in, m)           # conv2 taps, offset (1,1)
    x_stacked = jnp.concatenate([x1, x2], axis=0).astype(jnp.float32)   # (2*C_in, M)

    c_half = w1.shape[0]
    w1m = w1.reshape(c_half, c_in).astype(jnp.float32)
    w2m = w2.reshape(c_half, c_in).astype(jnp.float32)
    zeros = jnp.zeros((c_half, c_in), jnp.float32)
    w_block = jnp.concatenate(
        [jnp.concatenate([w1m, zeros], axis=1),
         jnp.concatenate([zeros, w2m], axis=1)], axis=0)  # (2*c_half, 2*C_in)
    return x_stacked, w_block, (N, Ho, Wo)


def _to_nchw(mat, meta):
    N, Ho, Wo = meta
    c = mat.shape[0]
    return jnp.transpose(mat.reshape(c, N, Ho, Wo), (1, 0, 2, 3))


def factorized_reduce(x, w1, w2):
    """x: (N, C_in, H, W); w1, w2: (C_out//2, C_in, 1, 1) -> (N, C_out, H//2, W//2)."""
    x_stacked, w_block, meta = _prep_operand(x, w1, w2)
    return _to_nchw(_fused_conv_bn(x_stacked, w_block), meta)


@jax.jit
def _reduction_forward(pprev, prev, r0_w1, r0_w2, r1_w1, r1_w2):
    x0, wb0, meta0 = _prep_operand(pprev, r0_w1, r0_w2)
    x1, wb1, meta1 = _prep_operand(prev, r1_w1, r1_w2)

    if x0.shape[1] == x1.shape[1]:
        # Same M -> fuse BOTH FactorizedReduce ops into one block-diagonal matmul,
        # halving pallas_call launches. BN stats remain per-channel so fusion is exact.
        c_rows0, c2_0 = wb0.shape
        c_rows1, c2_1 = wb1.shape
        x_all = jnp.concatenate([x0, x1], axis=0)                     # (c2_0+c2_1, M)
        w_all = jnp.zeros((c_rows0 + c_rows1, c2_0 + c2_1), jnp.float32)
        w_all = w_all.at[:c_rows0, :c2_0].set(wb0)
        w_all = w_all.at[c_rows0:, c2_0:].set(wb1)
        out = _fused_conv_bn(x_all, w_all)                            # (c_rows0+c_rows1, M)
        out0 = _to_nchw(out[:c_rows0], meta0)
        out1 = _to_nchw(out[c_rows0:], meta1)
    else:
        out0 = _to_nchw(_fused_conv_bn(x0, wb0), meta0)
        out1 = _to_nchw(_fused_conv_bn(x1, wb1), meta1)
    return out0, out1


def _init_conv_weight(key, c_out, c_in):
    # Deterministic kaiming-uniform-ish init for a 1x1 conv weight (c_out, c_in, 1, 1).
    bound = float(np.sqrt(1.0 / c_in))
    return jax.random.uniform(key, (c_out, c_in, 1, 1), jnp.float32, -bound, bound)


class ReductionLayerPallas:
    """ReductionLayer(in_channels_pp, in_channels_p, out_channels) forward via Pallas."""

    def __init__(self, in_channels_pp, in_channels_p, out_channels, key):
        c_half = out_channels // 2
        k0, k1, k2, k3 = jax.random.split(key, 4)
        # reduce0 params
        self.r0_w1 = _init_conv_weight(k0, c_half, in_channels_pp)
        self.r0_w2 = _init_conv_weight(k1, c_half, in_channels_pp)
        # reduce1 params
        self.r1_w1 = _init_conv_weight(k2, c_half, in_channels_p)
        self.r1_w2 = _init_conv_weight(k3, c_half, in_channels_p)

    def __call__(self, pprev, prev):
        return _reduction_forward(pprev, prev, self.r0_w1, self.r0_w2,
                                  self.r1_w1, self.r1_w2)


def _reference(x, w1, w2):
    """Pure-JAX reference (same math as the PyTorch module in training mode)."""
    N, C_in, H, W = x.shape
    c_half = w1.shape[0]
    x1 = x[:, :, 0::2, 0::2]
    x2 = x[:, :, 1::2, 1::2]
    y1 = jnp.einsum("nchw,oc->nohw", x1, w1.reshape(c_half, C_in))
    y2 = jnp.einsum("nchw,oc->nohw", x2, w2.reshape(c_half, C_in))
    y = jnp.concatenate([y1, y2], axis=1)
    mean = jnp.mean(y, axis=(0, 2, 3), keepdims=True)
    var = jnp.mean((y - mean) ** 2, axis=(0, 2, 3), keepdims=True)
    return (y - mean) / jnp.sqrt(var + _BN_EPS)


if __name__ == "__main__":
    key = jax.random.PRNGKey(0)
    k_params, k_pp, k_p = jax.random.split(key, 3)

    N, C_pp, C_p, C_out, H, W = 2, 4, 6, 8, 16, 16
    pprev = jax.random.normal(k_pp, (N, C_pp, H, W), jnp.float32)
    prev = jax.random.normal(k_p, (N, C_p, H, W), jnp.float32)

    layer = ReductionLayerPallas(C_pp, C_p, C_out, k_params)
    out0, out1 = layer(pprev, prev)
    out0 = jax.block_until_ready(out0)
    out1 = jax.block_until_ready(out1)

    assert out0.shape == (N, C_out, H // 2, W // 2), out0.shape
    assert out1.shape == (N, C_out, H // 2, W // 2), out1.shape

    ref0 = _reference(pprev, layer.r0_w1, layer.r0_w2)
    ref1 = _reference(prev, layer.r1_w1, layer.r1_w2)
    np.testing.assert_allclose(np.asarray(out0), np.asarray(ref0), rtol=1e-3, atol=1e-3)
    np.testing.assert_allclose(np.asarray(out1), np.asarray(ref1), rtol=1e-3, atol=1e-3)

    print("KERNEL_OK")
</pallas_src>

<mosaic_0001>
module attributes {stable_mosaic.version = 11 : i64} {
  func.func @_stats_kernel(%arg0: i32, %arg1: memref<20x128xf32, #tpu.memory_space<vmem>>, %arg2: memref<16x20xf32, #tpu.memory_space<vmem>>, %arg3: memref<16x1xf32, #tpu.memory_space<vmem>>, %arg4: memref<16x1xf32, #tpu.memory_space<vmem>>) attributes {dimension_semantics = [#tpu.dimension_semantics<arbitrary>], iteration_bounds = array<i64: 1>, scalar_prefetch = 0 : i64, scratch_operands = 0 : i64, tpu.core_type = #tpu.core_type<tc>, window_params = [{transform_indices = @transform_0, window_bounds = array<i64: 20, 128>}, {pipeline_mode = #tpu.pipeline_mode<synchronous>, transform_indices = @transform_1, window_bounds = array<i64: 16, 20>}, {pipeline_mode = #tpu.pipeline_mode<synchronous>, transform_indices = @transform_2, window_bounds = array<i64: 16, 1>}, {pipeline_mode = #tpu.pipeline_mode<synchronous>, transform_indices = @transform_3, window_bounds = array<i64: 16, 1>}]} {
    %c0_i32 = arith.constant 0 : i32
    %0 = arith.cmpi eq, %arg0, %c0_i32 : i32
    %1 = arith.extui %0 : i1 to i32
    %c0_i32_0 = arith.constant 0 : i32
    %2 = arith.cmpi ne, %1, %c0_i32_0 : i32
    scf.if %2 {
      %cst_14 = arith.constant 0.000000e+00 : f32
      %17 = vector.broadcast %cst_14 : f32 to vector<16x1xf32>
      %c0_15 = arith.constant 0 : index
      %c0_16 = arith.constant 0 : index
      %18 = vector.load %arg3[%c0_15, %c0_16] : memref<16x1xf32, #tpu.memory_space<vmem>>, vector<16x1xf32>
      tpu.vector_store %arg3[%c0_15, %c0_16], %17 {strides = array<i32>} : memref<16x1xf32, #tpu.memory_space<vmem>>, vector<16x1xf32>,
      %cst_17 = arith.constant 0.000000e+00 : f32
      %19 = vector.broadcast %cst_17 : f32 to vector<16x1xf32>
      %c0_18 = arith.constant 0 : index
      %c0_19 = arith.constant 0 : index
      %20 = vector.load %arg4[%c0_18, %c0_19] : memref<16x1xf32, #tpu.memory_space<vmem>>, vector<16x1xf32>
      tpu.vector_store %arg4[%c0_18, %c0_19], %19 {strides = array<i32>} : memref<16x1xf32, #tpu.memory_space<vmem>>, vector<16x1xf32>,
    } else {
    }
    %c0 = arith.constant 0 : index
    %c0_1 = arith.constant 0 : index
    %3 = vector.load %arg2[%c0, %c0_1] : memref<16x20xf32, #tpu.memory_space<vmem>>, vector<16x20xf32>
    %c0_2 = arith.constant 0 : index
    %c0_3 = arith.constant 0 : index
    %4 = vector.load %arg1[%c0_2, %c0_3] : memref<20x128xf32, #tpu.memory_space<vmem>>, vector<20x128xf32>
    %cst = arith.constant dense<0.000000e+00> : vector<16x128xf32>
    %5 = tpu.matmul %3, %4, %cst {dimension_numbers = #tpu.dot_dimension_numbers<[1], [0], [0], [1], [0, 0, 1, 1], [], []>} : vector<16x20xf32>, vector<20x128xf32>, vector<16x128xf32> -> vector<16x128xf32>
    %c0_4 = arith.constant 0 : index
    %c0_5 = arith.constant 0 : index
    %6 = vector.load %arg3[%c0_4, %c0_5] : memref<16x1xf32, #tpu.memory_space<vmem>>, vector<16x1xf32>
    %cst_6 = arith.constant dense<0.000000e+00> : vector<16xf32>
    %7 = vector.multi_reduction <add>, %5, %cst_6 [1] : vector<16x128xf32> to vector<16xf32>
    %8 = vector.shape_cast %7 : vector<16xf32> to vector<16x1xf32>
    %9 = arith.addf %6, %8 : vector<16x1xf32>
    %c0_7 = arith.constant 0 : index
    %c0_8 = arith.constant 0 : index
    %10 = vector.load %arg3[%c0_7, %c0_8] : memref<16x1xf32, #tpu.memory_space<vmem>>, vector<16x1xf32>
    tpu.vector_store %arg3[%c0_7, %c0_8], %9 {strides = array<i32>} : memref<16x1xf32, #tpu.memory_space<vmem>>, vector<16x1xf32>,
    %c0_9 = arith.constant 0 : index
    %c0_10 = arith.constant 0 : index
    %11 = vector.load %arg4[%c0_9, %c0_10] : memref<16x1xf32, #tpu.memory_space<vmem>>, vector<16x1xf32>
    %12 = arith.mulf %5, %5 : vector<16x128xf32>
    %cst_11 = arith.constant dense<0.000000e+00> : vector<16xf32>
    %13 = vector.multi_reduction <add>, %12, %cst_11 [1] : vector<16x128xf32> to vector<16xf32>
    %14 = vector.shape_cast %13 : vector<16xf32> to vector<16x1xf32>
    %15 = arith.addf %11, %14 : vector<16x1xf32>
    %c0_12 = arith.constant 0 : index
    %c0_13 = arith.constant 0 : index
    %16 = vector.load %arg4[%c0_12, %c0_13] : memref<16x1xf32, #tpu.memory_space<vmem>>, vector<16x1xf32>
    tpu.vector_store %arg4[%c0_12, %c0_13], %15 {strides = array<i32>} : memref<16x1xf32, #tpu.memory_space<vmem>>, vector<16x1xf32>,
    return
  }
  func.func @transform_0(%arg0: i32) -> (i32, i32) {
    %c0_i32 = arith.constant 0 : i32
    %c0_i32_0 = arith.constant 0 : i32
    return %c0_i32, %arg0 : i32, i32
  }
  func.func @transform_1(%arg0: i32) -> (i32, i32) {
    %c0_i32 = arith.constant 0 : i32
    %c0_i32_0 = arith.constant 0 : i32
    %c0_i32_1 = arith.constant 0 : i32
    return %c0_i32, %c0_i32_0 : i32, i32
  }
  func.func @transform_2(%arg0: i32) -> (i32, i32) {
    %c0_i32 = arith.constant 0 : i32
    %c0_i32_0 = arith.constant 0 : i32
    %c0_i32_1 = arith.constant 0 : i32
    return %c0_i32, %c0_i32_0 : i32, i32
  }
  func.func @transform_3(%arg0: i32) -> (i32, i32) {
    %c0_i32 = arith.constant 0 : i32
    %c0_i32_0 = arith.constant 0 : i32
    %c0_i32_1 = arith.constant 0 : i32
    return %c0_i32, %c0_i32_0 : i32, i32
  }
}

module attributes {stable_mosaic.version = 11 : i64} {
  func.func @_normalize_kernel(%arg0: i32, %arg1: memref<20x128xf32, #tpu.memory_space<vmem>>, %arg2: memref<16x20xf32, #tpu.memory_space<vmem>>, %arg3: memref<16x1xf32, #tpu.memory_space<vmem>>, %arg4: memref<16x128xf32, #tpu.memory_space<vmem>>) attributes {dimension_semantics = [#tpu.dimension_semantics<parallel>], iteration_bounds = array<i64: 1>, scalar_prefetch = 0 : i64, scratch_operands = 0 : i64, tpu.core_type = #tpu.core_type<tc>, window_params = [{transform_indices = @transform_0, window_bounds = array<i64: 20, 128>}, {pipeline_mode = #tpu.pipeline_mode<synchronous>, transform_indices = @transform_1, window_bounds = array<i64: 16, 20>}, {pipeline_mode = #tpu.pipeline_mode<synchronous>, transform_indices = @transform_2, window_bounds = array<i64: 16, 1>}, {transform_indices = @transform_3, window_bounds = array<i64: 16, 128>}]} {
    %c0 = arith.constant 0 : index
    %c0_0 = arith.constant 0 : index
    %0 = vector.load %arg2[%c0, %c0_0] : memref<16x20xf32, #tpu.memory_space<vmem>>, vector<16x20xf32>
    %c0_1 = arith.constant 0 : index
    %c0_2 = arith.constant 0 : index
    %1 = vector.load %arg1[%c0_1, %c0_2] : memref<20x128xf32, #tpu.memory_space<vmem>>, vector<20x128xf32>
    %cst = arith.constant dense<0.000000e+00> : vector<16x128xf32>
    %2 = tpu.matmul %0, %1, %cst {dimension_numbers = #tpu.dot_dimension_numbers<[1], [0], [0], [1], [0, 0, 1, 1], [], []>} : vector<16x20xf32>, vector<20x128xf32>, vector<16x128xf32> -> vector<16x128xf32>
    %c0_3 = arith.constant 0 : index
    %c0_4 = arith.constant 0 : index
    %3 = vector.load %arg3[%c0_3, %c0_4] : memref<16x1xf32, #tpu.memory_space<vmem>>, vector<16x1xf32>
    %4 = vector.broadcast %3 : vector<16x1xf32> to vector<16x128xf32>
    %5 = arith.addf %2, %4 : vector<16x128xf32>
    %c0_5 = arith.constant 0 : index
    %c0_6 = arith.constant 0 : index
    %6 = vector.load %arg4[%c0_5, %c0_6] : memref<16x128xf32, #tpu.memory_space<vmem>>, vector<16x128xf32>
    tpu.vector_store %arg4[%c0_5, %c0_6], %5 {strides = array<i32>} : memref<16x128xf32, #tpu.memory_space<vmem>>, vector<16x128xf32>,
    return
  }
  func.func @transform_0(%arg0: i32) -> (i32, i32) {
    %c0_i32 = arith.constant 0 : i32
    %c0_i32_0 = arith.constant 0 : i32
    return %c0_i32, %arg0 : i32, i32
  }
  func.func @transform_1(%arg0: i32) -> (i32, i32) {
    %c0_i32 = arith.constant 0 : i32
    %c0_i32_0 = arith.constant 0 : i32
    %c0_i32_1 = arith.constant 0 : i32
    return %c0_i32, %c0_i32_0 : i32, i32
  }
  func.func @transform_2(%arg0: i32) -> (i32, i32) {
    %c0_i32 = arith.constant 0 : i32
    %c0_i32_0 = arith.constant 0 : i32
    %c0_i32_1 = arith.constant 0 : i32
    return %c0_i32, %c0_i32_0 : i32, i32
  }
  func.func @transform_3(%arg0: i32) -> (i32, i32) {
    %c0_i32 = arith.constant 0 : i32
    %c0_i32_0 = arith.constant 0 : i32
    return %c0_i32, %arg0 : i32, i32
  }
}

</mosaic_0001>

<llo_original>
// kernel: _reduction_forward.3
$region0: #{_reduction_forward.3}
  #allocation0 [shape = 'u32[]', space=smem, size = 0x4, offset = 0x4, fixed_abs, tag = 'smem constant byte address 0x4 - core index']
  #allocation1 [shape = 'u32[144,128]{1,0:T(1,128)}', space=vmem, size = 0x12000, scoped, tag = 'internal scratch']
  %s0 = inlined_call_operand.vmem [shape: f32[20,128], index: 0, kind: input, shape index: {}]
  %s1 = inlined_call_operand.vmem [shape: f32[16,20], index: 1, kind: input, shape index: {}]
  %s2 = inlined_call_operand.vmem [shape: f32[16,1], index: 2, kind: input, shape index: {}]
  %s3 = inlined_call_operand.vmem [shape: f32[16,128], index: 3, kind: output, shape index: {}]
  %s4 = sld [smem:[#allocation0]]
  $region22: #{_reduction_forward.3} parent=0
    _
  %s6 = ssub.s32 1, %s4
  %s7 = scalar_select 0, %s6, %s4
  // Predicated region
  $region2: #{_reduction_forward.3} parent=0 // pred_check
    _
  $region3: #{_reduction_forward.3} parent=0 // pred_check_branch
    %9 = sbr.rel (0) target = $region5
  $region4: #{_reduction_forward.3} parent=0 // pred_region
    _
  $region5: #{_reduction_forward.3} parent=0 // pred_fallthru
    _
  // Predicated region
  $region6: #{_reduction_forward.3} parent=0 // pred_check
    _
  $region7: #{_reduction_forward.3} parent=0 // pred_check_branch
    %11 = sbr.rel (0) target = $region9
  $region8: #{_reduction_forward.3} parent=0 // pred_region
    _
  $region9: #{_reduction_forward.3} parent=0 // pred_fallthru
    _
  // Predicated region
  $region10: #{_reduction_forward.3} parent=0 // pred_check
    _
  $region11: #{_reduction_forward.3} parent=0 // pred_check_branch
    %13 = sbr.rel (0) target = $region13
  $region12: #{_reduction_forward.3} parent=0 // pred_region
    _
  $region13: #{_reduction_forward.3} parent=0 // pred_fallthru
    _
  %v14 = vld [vmem:[%s1] sm:$0xff]
  %v15 = vld [vmem:[%s1 + $0x8] sm:$0xff]
  %v16 = vld [vmem:[%s0] sm:$0xff]
  %v17 = vld [vmem:[%s0 + $0x8] sm:$0xff]
  %v18 = vld [vmem:[%s0 + $0x10] sm:$0xf]
  %v19 = vld [vmem:[%s2] sm:$0xff]
  %v20 = vld [vmem:[%s2 + $0x8] sm:$0xff]
  %22 = vset.pattern.permute.xlu0 0
  %23 = vperm.xlu0 %22, %v19
  %v24 = vpop.permute.xlu0 %23
  %27 = vset.pattern.permute.xlu0 0
  %28 = vperm.xlu0 %27, %v20
  %v29 = vpop.permute.xlu0 %28
  %vm31 = vcmask 162816
  %v33 = vsel %vm31, %v14, 0
  %v36 = vsel %vm31, %v15, 0
  %vm38 = vcmask 1043456
  %v40 = vsel %vm38, %v18, 0
  %42 = vmatprep.subr.mxu0 0.0
  %43 = vmatpush1.msra.mxu0 %v16
  %44 = vmatprep.subr.mxu0 0.0
  %45 = vmatpush1.msra.mxu0 %v17
  %46 = vmatprep.subr.mxu0 0.0
  %47 = vmatpush1.msra.mxu0 %v40
  %48 = vmatprep.subr.mxu0 0.0
  %49 = vmatpush1.msra.mxu0 0.0
  %50 = vmatprep.subr.mxu0 0.0
  %51 = vmatpush1.msra.mxu0 0.0
  %52 = vmatprep.subr.mxu0 0.0
  %53 = vmatpush1.msra.mxu0 0.0
  %54 = vmatprep.subr.mxu0 0.0
  %55 = vmatpush1.msra.mxu0 0.0
  %56 = vmatprep.subr.mxu0 0.0
  %57 = vmatpush1.msra.mxu0 0.0
  %58 = vmatprep.subr.mxu0 0.0
  %59 = vmatpush1.msra.mxu0 0.0
  %60 = vmatprep.subr.mxu0 0.0
  %61 = vmatpush1.msra.mxu0 0.0
  %62 = vmatprep.subr.mxu0 0.0
  %63 = vmatpush1.msra.mxu0 0.0
  %64 = vmatprep.subr.mxu0 0.0
  %65 = vmatpush1.msra.mxu0 0.0
  %66 = vmatprep.subr.mxu0 0.0
  %67 = vmatpush1.msra.mxu0 0.0
  %68 = vmatprep.subr.mxu0 0.0
  %69 = vmatpush1.msra.mxu0 0.0
  %70 = vmatprep.subr.mxu0 0.0
  %71 = vmatpush1.msra.mxu0 0.0
  %72 = vmatprep.subr.mxu0 0.0
  %73 = vmatpush1.msra.mxu0 0.0
  %74 = vmatprep.subr.mxu0 0.0
  %75 = vmatpush1.msra.mxu0 0.0
  %76 = vmatprep.subr.mxu0 0.0
  %77 = vmatpush1.msra.mxu0 0.0
  %78 = vmatprep.subr.mxu0 0.0
  %79 = vmatpush1.msra.mxu0 0.0
  %80 = vmatprep.subr.mxu0 0.0
  %81 = vmatpush1.msra.mxu0 0.0
  %82 = vmatprep.subr.mxu0 0.0
  %83 = vmatpush1.msra.mxu0 0.0
  %84 = vmatprep.subr.mxu0 0.0
  %85 = vmatpush1.msra.mxu0 0.0
  %86 = vmatprep.subr.mxu0 0.0
  %87 = vmatpush1.msra.mxu0 0.0
  %88 = vmatprep.subr.mxu0 0.0
  %89 = vmatpush1.msra.mxu0 0.0
  %90 = vmatprep.subr.mxu0 0.0
  %91 = vmatpush1.msra.mxu0 0.0
  %92 = vmatprep.subr.mxu0 0.0
  %93 = vmatpush1.msra.mxu0 0.0
  %94 = vmatprep.subr.mxu0 0.0
  %95 = vmatpush1.msra.mxu0 0.0
  %96 = vmatprep.subr.mxu0 0.0
  %97 = vmatpush1.msra.mxu0 0.0
  %98 = vmatprep.subr.mxu0 0.0
  %99 = vmatpush1.msra.mxu0 0.0
  %100 = vmatprep.subr.mxu0 0.0
  %101 = vmatpush1.msra.mxu0 0.0
  %102 = vmatprep.subr.mxu0 0.0
  %103 = vmatpush1.msra.mxu0 0.0
  %104 = vmatprep.subr.mxu0 0.0
  %105 = vmatpush1.msra.mxu0 0.0
  %106 = vmatprep.mubr.f32.mxu0 0.0
  %107 = vmatmul.mubr.f32.gmra.mrb[0].mxu0 %v33
  %v108 = vpop.f32.mrb[0].mxu0
  %v109 = vadd.f32 %v24, %v108
  %v110 = vpop.f32.mrb[0].mxu0
  %111 = vmatprep.mubr.f32.mxu0 0.0
  %112 = vmatmul.mubr.f32.gmra.mrb[0].mxu0 %v36
  %v113 = vpop.f32.mrb[0].mxu0
  %v114 = vadd.f32 %v29, %v113
  %v115 = vpop.f32.mrb[0].mxu0
  %116 = vdwg.mxu0
  %117 = vst [vmem:[%s3] sm:$0xff] %v109
  %118 = vst [vmem:[%s3 + $0x8] sm:$0xff] %v114
  // Predicated region
  $region14: #{_reduction_forward.3} parent=0 // pred_check
    _
  $region15: #{_reduction_forward.3} parent=0 // pred_check_branch
    %120 = sbr.rel (0) target = $region17
  $region16: #{_reduction_forward.3} parent=0 // pred_region
    _
  $region17: #{_reduction_forward.3} parent=0 // pred_fallthru
    _
  // Predicated region
  $region18: #{_reduction_forward.3} parent=0 // pred_check
    _
  $region19: #{_reduction_forward.3} parent=0 // pred_check_branch
    %122 = sbr.rel (0) target = $region21
  $region20: #{_reduction_forward.3} parent=0 // pred_region
    _
  $region21: #{_reduction_forward.3} parent=0 // pred_fallthru
    _

// kernel: _reduction_forward.2
$region0: #{_reduction_forward.2}
  #allocation0 [shape = 'u32[]', space=smem, size = 0x4, offset = 0x4, fixed_abs, tag = 'smem constant byte address 0x4 - core index']
  #allocation1 [shape = 'u32[144,128]{1,0:T(1,128)}', space=vmem, size = 0x12000, scoped, tag = 'internal scratch']
  %s0 = inlined_call_operand.vmem [shape: f32[20,128], index: 0, kind: input, shape index: {}]
  %s1 = inlined_call_operand.vmem [shape: f32[16,20], index: 1, kind: input, shape index: {}]
  %s2 = inlined_call_operand.vmem [shape: f32[16,1], index: 2, kind: output, shape index: {0}]
  %s3 = inlined_call_operand.vmem [shape: f32[16,1], index: 3, kind: output, shape index: {1}]
  %4 = xla_tuple %s2, %s3
  %s5 = sld [smem:[#allocation0]]
  $region30: #{_reduction_forward.2} parent=0
    _
  %s7 = ssub.s32 1, %s5
  %s8 = scalar_select 0, %s7, %s5
  // Predicated region
  $region2: #{_reduction_forward.2} parent=0 // pred_check
    _
  $region3: #{_reduction_forward.2} parent=0 // pred_check_branch
    %10 = sbr.rel (0) target = $region5
  $region4: #{_reduction_forward.2} parent=0 // pred_region
    _
  $region5: #{_reduction_forward.2} parent=0 // pred_fallthru
    _
  // Predicated region
  $region6: #{_reduction_forward.2} parent=0 // pred_check
    _
  $region7: #{_reduction_forward.2} parent=0 // pred_check_branch
    %12 = sbr.rel (0) target = $region9
  $region8: #{_reduction_forward.2} parent=0 // pred_region
    _
  $region9: #{_reduction_forward.2} parent=0 // pred_fallthru
    _
  %p13 = scmp.eq.s32.totalorder 0, 0
  // Predicated region
  $region10: #{_reduction_forward.2} parent=0 // pred_check
    %p14 = pneg %p13
  $region11: #{_reduction_forward.2} parent=0 // pred_check_branch
    %16 = sbr.rel (%p14) target = $region13
  $region12: #{_reduction_forward.2} parent=0 // pred_region
    %vm17 = vcmask 7168
    %18 = vst.msk [vmem:[%s2] sm:$0xff] %vm17, 0.0
    %19 = vst.msk [vmem:[%s2 + $0x8] sm:$0xff] %vm17, 0.0
    %20 = vst.msk [vmem:[%s3] sm:$0xff] %vm17, 0.0
    %21 = vst.msk [vmem:[%s3 + $0x8] sm:$0xff] %vm17, 0.0
  $region13: #{_reduction_forward.2} parent=0 // pred_fallthru
    _
  %v22 = vld [vmem:[%s1] sm:$0xff]
  %v23 = vld [vmem:[%s1 + $0x8] sm:$0xff]
  %v24 = vld [vmem:[%s0] sm:$0xff]
  %v25 = vld [vmem:[%s0 + $0x8] sm:$0xff]
  %v26 = vld [vmem:[%s0 + $0x10] sm:$0xf]
  %vm27 = vcmask 162816
  %v29 = vsel %vm27, %v22, 0
  %v32 = vsel %vm27, %v23, 0
  %vm34 = vcmask 1043456
  %v36 = vsel %vm34, %v26, 0
  %38 = vmatprep.subr.mxu0 0.0
  %39 = vmatpush1.msra.mxu0 %v24
  %40 = vmatprep.subr.mxu0 0.0
  %41 = vmatpush1.msra.mxu0 %v25
  %42 = vmatprep.subr.mxu0 0.0
  %43 = vmatpush1.msra.mxu0 %v36
  %44 = vmatprep.subr.mxu0 0.0
  %45 = vmatpush1.msra.mxu0 0.0
  %46 = vmatprep.subr.mxu0 0.0
  %47 = vmatpush1.msra.mxu0 0.0
  %48 = vmatprep.subr.mxu0 0.0
  %49 = vmatpush1.msra.mxu0 0.0
  %50 = vmatprep.subr.mxu0 0.0
  %51 = vmatpush1.msra.mxu0 0.0
  %52 = vmatprep.subr.mxu0 0.0
  %53 = vmatpush1.msra.mxu0 0.0
  %54 = vmatprep.subr.mxu0 0.0
  %55 = vmatpush1.msra.mxu0 0.0
  %56 = vmatprep.subr.mxu0 0.0
  %57 = vmatpush1.msra.mxu0 0.0
  %58 = vmatprep.subr.mxu0 0.0
  %59 = vmatpush1.msra.mxu0 0.0
  %60 = vmatprep.subr.mxu0 0.0
  %61 = vmatpush1.msra.mxu0 0.0
  %62 = vmatprep.subr.mxu0 0.0
  %63 = vmatpush1.msra.mxu0 0.0
  %64 = vmatprep.subr.mxu0 0.0
  %65 = vmatpush1.msra.mxu0 0.0
  %66 = vmatprep.subr.mxu0 0.0
  %67 = vmatpush1.msra.mxu0 0.0
  %68 = vmatprep.subr.mxu0 0.0
  %69 = vmatpush1.msra.mxu0 0.0
  %70 = vmatprep.subr.mxu0 0.0
  %71 = vmatpush1.msra.mxu0 0.0
  %72 = vmatprep.subr.mxu0 0.0
  %73 = vmatpush1.msra.mxu0 0.0
  %74 = vmatprep.subr.mxu0 0.0
  %75 = vmatpush1.msra.mxu0 0.0
  %76 = vmatprep.subr.mxu0 0.0
  %77 = vmatpush1.msra.mxu0 0.0
  %78 = vmatprep.subr.mxu0 0.0
  %79 = vmatpush1.msra.mxu0 0.0
  %80 = vmatprep.subr.mxu0 0.0
  %81 = vmatpush1.msra.mxu0 0.0
  %82 = vmatprep.subr.mxu0 0.0
  %83 = vmatpush1.msra.mxu0 0.0
  %84 = vmatprep.subr.mxu0 0.0
  %85 = vmatpush1.msra.mxu0 0.0
  %86 = vmatprep.subr.mxu0 0.0
  %87 = vmatpush1.msra.mxu0 0.0
  %88 = vmatprep.subr.mxu0 0.0
  %89 = vmatpush1.msra.mxu0 0.0
  %90 = vmatprep.subr.mxu0 0.0
  %91 = vmatpush1.msra.mxu0 0.0
  %92 = vmatprep.subr.mxu0 0.0
  %93 = vmatpush1.msra.mxu0 0.0
  %94 = vmatprep.subr.mxu0 0.0
  %95 = vmatpush1.msra.mxu0 0.0
  %96 = vmatprep.subr.mxu0 0.0
  %97 = vmatpush1.msra.mxu0 0.0
  %98 = vmatprep.subr.mxu0 0.0
  %99 = vmatpush1.msra.mxu0 0.0
  %100 = vmatprep.subr.mxu0 0.0
  %101 = vmatpush1.msra.mxu0 0.0
  %102 = vmatprep.mubr.f32.mxu0 0.0
  %103 = vmatmul.mubr.f32.gmra.mrb[0].mxu0 %v29
  %v104 = vpop.f32.mrb[0].mxu0
  %v105 = vadd.f32 0.0, %v104
  %v106 = vpop.f32.mrb[0].mxu0
  %107 = vmatprep.mubr.f32.mxu0 0.0
  %108 = vmatmul.mubr.f32.gmra.mrb[0].mxu0 %v32
  %v109 = vpop.f32.mrb[0].mxu0
  %v110 = vadd.f32 0.0, %v109
  %v111 = vpop.f32.mrb[0].mxu0
  %112 = vdwg.mxu0
  %v113 = vld [vmem:[%s2] sm:$0xff]
  %v114 = vld [vmem:[%s2 + $0x8] sm:$0xff]
  %115 = vadd.xlane.f32.xlu0 %v105
  %v116 = vpop.xlane.xlu0 %115
  %117 = vadd.xlane.f32.xlu0 %v110
  %v118 = vpop.xlane.xlu0 %117
  %v119 = vadd.f32 %v113, %v116
  %v120 = vadd.f32 %v114, %v118
  %vm121 = vcmask 7168
  %122 = vst.msk [vmem:[%s2] sm:$0xff] %vm121, %v119
  %123 = vst.msk [vmem:[%s2 + $0x8] sm:$0xff] %vm121, %v120
  %v124 = vld [vmem:[%s3] sm:$0xff]
  %v125 = vld [vmem:[%s3 + $0x8] sm:$0xff]
  %v126 = vmul.f32 %v105, %v105
  %v127 = vmul.f32 %v110, %v110
  %128 = vadd.xlane.f32.xlu0 %v126
  %v129 = vpop.xlane.xlu0 %128
  %130 = vadd.xlane.f32.xlu0 %v127
  %v131 = vpop.xlane.xlu0 %130
  %v132 = vadd.f32 %v124, %v129
  %v133 = vadd.f32 %v125, %v131
  %134 = vst.msk [vmem:[%s3] sm:$0xff] %vm121, %v132
  %135 = vst.msk [vmem:[%s3 + $0x8] sm:$0xff] %vm121, %v133
  // Predicated region
  $region14: #{_reduction_forward.2} parent=0 // pred_check
    _
  $region15: #{_reduction_forward.2} parent=0 // pred_check_branch
    %137 = sbr.rel (0) target = $region17
  $region16: #{_reduction_forward.2} parent=0 // pred_region
    _
  $region17: #{_reduction_forward.2} parent=0 // pred_fallthru
    _
  // Predicated region
  $region18: #{_reduction_forward.2} parent=0 // pred_check
    _
  $region19: #{_reduction_forward.2} parent=0 // pred_check_branch
    %139 = sbr.rel (0) target = $region21
  $region20: #{_reduction_forward.2} parent=0 // pred_region
    _
  $region21: #{_reduction_forward.2} parent=0 // pred_fallthru
    _
  // Predicated region
  $region22: #{_reduction_forward.2} parent=0 // pred_check
    _
  $region23: #{_reduction_forward.2} parent=0 // pred_check_branch
    %141 = sbr.rel (0) target = $region25
  $region24: #{_reduction_forward.2} parent=0 // pred_region
    _
  $region25: #{_reduction_forward.2} parent=0 // pred_fallthru
    _
  // Predicated region
  $region26: #{_reduction_forward.2} parent=0 // pred_check
    _
  $region27: #{_reduction_forward.2} parent=0 // pred_check_branch
    %143 = sbr.rel (0) target = $region29
  $region28: #{_reduction_forward.2} parent=0 // pred_region
    _
  $region29: #{_reduction_forward.2} parent=0 // pred_fallthru
    _

</llo_original>
